<compile_context>
chip_gen: v7x
topology: tpu7x:2x2x1
jax: 0.10.0
libtpu: 0.0.40
codegen_flags: <defaults>
</compile_context>

<pallas_src>
import functools
import numpy as np

import jax
import jax.numpy as jnp
from jax.experimental import pallas as pl
from jax.experimental.pallas import tpu as pltpu


def _round_up(x, m):
    return ((x + m - 1) // m) * m


def _pick_tiles(bs, num_queries, t_pad, c_pad):
    """Pick (tn, nq_pad, tb, t_pad).

    Big tiles: a single T tile (no cross-T recompute of the focal chain) and the full
    padded query range per grid step, bounded so the double-buffered working set stays
    inside every generation's default scoped-VMEM window (v5e: 16 MiB).  Keeps at least
    two parallel grid blocks so v7x's second TensorCore gets work.
    """
    if t_pad > 2048:                       # cap lanes; re-pad so 2048 divides t_pad
        t_pad = _round_up(t_pad, 2048)
        tb = 2048
    else:
        tb = t_pad

    nq8 = _round_up(num_queries, 8)

    def vmem_one_buf(tn):                  # bytes for one pipeline buffer set
        return 4 * (tn * c_pad + tn * 4 + 4 * tb + tb + tn * tb)

    budget = 6 << 20                       # x2 double buffering ~= 12 MiB < 16 MiB (v5e)
    cands = [c for c in (nq8, 2048, 1024, 512, 256, 128) if c <= nq8] or [nq8]
    tn = cands[-1]
    for c in cands:
        if vmem_one_buf(c) <= budget:
            tn = c
            break

    # v7x has two TensorCores; a (1,1,1) grid would idle one of them.
    if bs == 1 and (t_pad // tb) == 1 and tn >= nq8 and nq8 >= 16:
        tn = _round_up((nq8 + 1) // 2, 8)

    nq_pad = _round_up(num_queries, tn)
    return tn, nq_pad, tb, t_pad


def _fpow(x, e):
    # exact fast path for the default gamma=2.0; generic float exponent otherwise
    if float(e) == 2.0:
        return x * x
    return jnp.exp(e * jnp.log(jnp.maximum(x, 1e-30)))


def _cost_kernel(logits_ref, pboxes_ref, gtb_ref, labels_ref, out_ref,
                 *, alpha, gamma, coef_class, coef_bbox, coef_giou):
    c_pad = logits_ref.shape[-1]
    tb = labels_ref.shape[-1]

    # ---- focal-style classification cost (stable softplus form) -------------------
    x = logits_ref[...].astype(jnp.float32)                       # [TN, Cp]
    ax = jnp.abs(x)
    sp_neg = jnp.maximum(-x, 0.0) + jnp.log(1.0 + jnp.exp(-ax))   # softplus(-x) = -log p
    sp_pos = x + sp_neg                                           # softplus(x)  = -log(1-p)
    p = jnp.exp(-sp_neg)                                          # sigmoid(x), no overflow
    pos_cost = alpha * _fpow(1.0 - p, gamma) * sp_neg
    neg_cost = (1.0 - alpha) * _fpow(p, gamma) * sp_pos
    # fold coef_class on the [TN, Cp] side, then gather the per-target class columns
    # via a one-hot matmul on the MXU; one-hot is built in-kernel from int32 labels
    # (padded targets carry label == Cp -> all-zero column -> zero class cost).
    cls_vec = coef_class * (pos_cost - neg_cost)                  # [TN, Cp]
    labels = labels_ref[...]                                      # [1, TB] int32
    onehot = (jax.lax.broadcasted_iota(jnp.int32, (c_pad, tb), 0)
              == labels).astype(jnp.float32)                      # [Cp, TB]
    cost_class = jnp.dot(cls_vec, onehot,
                         preferred_element_type=jnp.float32)      # [TN, TB]

    # ---- pairwise box costs --------------------------------------------------------
    pb = pboxes_ref[...].astype(jnp.float32)                      # [TN, 4]
    gb = gtb_ref[...].astype(jnp.float32)                         # [4, TB]
    pcx, pcy, pw, ph = pb[:, 0:1], pb[:, 1:2], pb[:, 2:3], pb[:, 3:4]   # [TN,1]
    gcx, gcy, gw, gh = gb[0:1, :], gb[1:2, :], gb[2:3, :], gb[3:4, :]   # [1,TB]

    # L1 cdist in cxcywh space, coef_bbox folded into the tiny coordinate vectors
    if coef_bbox >= 0.0:
        cb = float(coef_bbox)
        cost_bbox = (jnp.abs(cb * pcx - cb * gcx) + jnp.abs(cb * pcy - cb * gcy)
                     + jnp.abs(cb * pw - cb * gw) + jnp.abs(cb * ph - cb * gh))
    else:  # unusual negative weight: keep the explicit multiply
        cost_bbox = coef_bbox * (jnp.abs(pcx - gcx) + jnp.abs(pcy - gcy)
                                 + jnp.abs(pw - gw) + jnp.abs(ph - gh))

    # cxcywh -> xyxy
    px0, py0 = pcx - pw * 0.5, pcy - ph * 0.5
    px1, py1 = pcx + pw * 0.5, pcy + ph * 0.5
    gx0, gy0 = gcx - gw * 0.5, gcy - gh * 0.5
    gx1, gy1 = gcx + gw * 0.5, gcy + gh * 0.5

    area_p = pw * ph                                              # [TN, 1]
    area_g = gw * gh                                              # [1, TB]

    inter_w = jnp.maximum(jnp.minimum(px1, gx1) - jnp.maximum(px0, gx0), 0.0)
    inter_h = jnp.maximum(jnp.minimum(py1, gy1) - jnp.maximum(py0, gy0), 0.0)
    inter = inter_w * inter_h
    union = area_p + area_g - inter

    enc_w = jnp.maximum(px1, gx1) - jnp.minimum(px0, gx0)
    enc_h = jnp.maximum(py1, gy1) - jnp.minimum(py0, gy0)
    enc = enc_w * enc_h

    # -coef_giou * giou fused into a single reciprocal: approx rcp on the (idle) EUP
    # slot + one Newton step (2 VPU ops) keeps ~f32 accuracy.  coef_giou folded into
    # the numerator; denominator guarded against degenerate boxes.
    num = (enc - union) * union - inter * enc
    den = jnp.maximum(union * enc, 1e-12)
    r = pl.reciprocal(den, approx=True)
    r = r * (2.0 - den * r)                                       # Newton refinement
    neg_giou_scaled = (coef_giou * num) * r

    out_ref[...] = cost_class + cost_bbox + neg_giou_scaled


def linear_sum_assignment_np(cost):
    """Hungarian algorithm (Jonker/e-maxx style, O(n^3)) for dense rectangular costs.
    Returns (row_idx, col_idx) sorted by row, equivalent-optimal to scipy's."""
    cost = np.asarray(cost, dtype=np.float64)
    transposed = False
    if cost.shape[0] > cost.shape[1]:
        cost = cost.T
        transposed = True
    n, m = cost.shape
    INF = float("inf")
    u = np.zeros(n + 1)
    v = np.zeros(m + 1)
    p = np.zeros(m + 1, dtype=np.int64)
    way = np.zeros(m + 1, dtype=np.int64)
    for i in range(1, n + 1):
        p[0] = i
        j0 = 0
        minv = np.full(m + 1, INF)
        used = np.zeros(m + 1, dtype=bool)
        while True:
            used[j0] = True
            i0 = p[j0]
            delta = INF
            j1 = -1
            for j in range(1, m + 1):
                if not used[j]:
                    cur = cost[i0 - 1, j - 1] - u[i0] - v[j]
                    if cur < minv[j]:
                        minv[j] = cur
                        way[j] = j0
                    if minv[j] < delta:
                        delta = minv[j]
                        j1 = j
            for j in range(m + 1):
                if used[j]:
                    u[p[j]] += delta
                    v[j] -= delta
                else:
                    minv[j] -= delta
            j0 = j1
            if p[j0] == 0:
                break
        while True:
            j1 = way[j0]
            p[j0] = p[j1]
            j0 = j1
            if j0 == 0:
                break
    rows, cols = [], []
    for j in range(1, m + 1):
        if p[j] != 0:
            rows.append(p[j] - 1)
            cols.append(j - 1)
    rows = np.asarray(rows, dtype=np.int64)
    cols = np.asarray(cols, dtype=np.int64)
    if transposed:
        rows, cols = cols, rows
    order = np.argsort(rows)
    return rows[order], cols[order]


class HungarianMatcher:
    def __init__(self, coef_class=2.0, coef_bbox=5.0, coef_giou=2.0, alpha=0.25,
                 gamma=2.0, iou_order_alpha=4.0, high_quality_matches=False):
        assert coef_class != 0 or coef_bbox != 0 or coef_giou != 0, "all costs cant be 0"
        self.coef_class = float(coef_class)
        self.coef_bbox = float(coef_bbox)
        self.coef_giou = float(coef_giou)
        self.alpha = float(alpha)
        self.gamma = float(gamma)
        self.iou_order_alpha = float(iou_order_alpha)
        # TODO(synk): high_quality_matches branch (class_score * iou**iou_order_alpha) not implemented.
        assert not high_quality_matches
        self.high_quality_matches = high_quality_matches

    def _cost_blocks(self, pred_logits, pred_boxes, annotations):
        """Per-image block-diagonal cost tiles: [bs, NQ_pad, T_pad]."""
        bs, num_queries, num_classes = pred_logits.shape
        sizes = [int(a["boxes"].shape[0]) for a in annotations]
        tmax = max(max(sizes), 1)

        c_pad = _round_up(num_classes, 128)            # MXU contraction dim
        t_pad = _round_up(tmax, 128)                   # lanes (targets)
        tn, nq_pad, tb, t_pad = _pick_tiles(bs, num_queries, t_pad, c_pad)

        # ---- pred side padding (device) ----
        logits_p = jnp.zeros((bs, nq_pad, c_pad), jnp.float32)
        logits_p = logits_p.at[:, :num_queries, :num_classes].set(
            pred_logits.astype(jnp.float32))
        # pad pred rows with a valid dummy box so padded region stays finite
        boxes_p = jnp.full((bs, nq_pad, 4), 0.5, jnp.float32)
        boxes_p = boxes_p.at[:, :num_queries, :].set(pred_boxes.astype(jnp.float32))

        # ---- gt side padding (device; tiny ops, no big host->device transfer) ----
        gtb_rows, lab_rows = [], []
        for a in annotations:
            b = jnp.asarray(a["boxes"], jnp.float32).reshape(-1, 4)
            l = jnp.asarray(a["labels"], jnp.int32).reshape(-1)
            s = int(b.shape[0])
            b_pad = jnp.full((t_pad, 4), 0.5, jnp.float32).at[:s, :].set(b)
            l_pad = jnp.full((t_pad,), c_pad, jnp.int32).at[:s].set(l)  # c_pad = "no class"
            gtb_rows.append(b_pad.T)            # [4, t_pad]
            lab_rows.append(l_pad[None, :])     # [1, t_pad]
        gtb_t = jnp.stack(gtb_rows)             # [bs, 4, t_pad]
        labels_t = jnp.stack(lab_rows)          # [bs, 1, t_pad] int32

        kernel = functools.partial(
            _cost_kernel, alpha=self.alpha, gamma=self.gamma,
            coef_class=self.coef_class, coef_bbox=self.coef_bbox,
            coef_giou=self.coef_giou)

        # TODO(synk): if t_pad ever exceeds the 2048-lane cap (T is tiled), the focal
        # [tn, c_pad] chain is recomputed per T tile; cache it in VMEM scratch with an
        # "arbitrary" innermost j axis if that case becomes common.
        grid = (bs, nq_pad // tn, t_pad // tb)
        cost = pl.pallas_call(
            kernel,
            out_shape=jax.ShapeDtypeStruct((bs, nq_pad, t_pad), jnp.float32),
            grid_spec=pltpu.PrefetchScalarGridSpec(
                num_scalar_prefetch=0,
                grid=grid,
                in_specs=[
                    pl.BlockSpec((None, tn, c_pad), lambda b, i, j: (b, i, 0)),
                    pl.BlockSpec((None, tn, 4), lambda b, i, j: (b, i, 0)),
                    pl.BlockSpec((None, 4, tb), lambda b, i, j: (b, 0, j)),
                    pl.BlockSpec((None, 1, tb), lambda b, i, j: (b, 0, j)),
                ],
                out_specs=pl.BlockSpec((None, tn, tb), lambda b, i, j: (b, i, j)),
            ),
            compiler_params=pltpu.CompilerParams(
                dimension_semantics=("parallel", "parallel", "parallel")),
        )(logits_p, boxes_p, gtb_t, labels_t)
        return cost, sizes, num_queries

    def forward(self, pred_logits, pred_boxes, annotations, return_cost=False):
        C, sizes, num_queries = self._cost_blocks(pred_logits, pred_boxes, annotations)
        C = np.asarray(jax.block_until_ready(C))

        # TODO(synk): the Hungarian assignment (scipy.linear_sum_assignment) is a
        # sequential scalar algorithm with no clean Pallas equivalent; it runs on host.
        indices = []
        cost_blocks = []
        for i, s in enumerate(sizes):
            c_i = C[i, :num_queries, :s]
            ri, cj = linear_sum_assignment_np(c_i)
            indices.append((ri.astype(np.int64), cj.astype(np.int64)))
            cost_blocks.append(c_i)
        if return_cost:
            return indices, cost_blocks
        return indices


def _reference_cost_np(pred_logits, pred_boxes, gt_class, gt_boxes,
                       alpha, gamma, cc, cb, cg):
    p = 1.0 / (1.0 + np.exp(-pred_logits.astype(np.float64)))
    neg = (1 - alpha) * p ** gamma * (-np.log(1 - p + 1e-8))
    pos = alpha * (1 - p) ** gamma * (-np.log(p + 1e-8))
    cost_class = pos[:, gt_class] - neg[:, gt_class]
    cost_bbox = np.abs(pred_boxes[:, None, :] - gt_boxes[None, :, :]).sum(-1)

    def to_xyxy(b):
        cx, cy, w, h = b[:, 0], b[:, 1], b[:, 2], b[:, 3]
        return np.stack([cx - w / 2, cy - h / 2, cx + w / 2, cy + h / 2], -1)

    pb, gb = to_xyxy(pred_boxes.astype(np.float64)), to_xyxy(gt_boxes.astype(np.float64))
    area_p = (pb[:, 2] - pb[:, 0]) * (pb[:, 3] - pb[:, 1])
    area_g = (gb[:, 2] - gb[:, 0]) * (gb[:, 3] - gb[:, 1])
    lt = np.maximum(pb[:, None, :2], gb[None, :, :2])
    rb = np.minimum(pb[:, None, 2:], gb[None, :, 2:])
    wh = np.clip(rb - lt, 0, None)
    inter = wh[..., 0] * wh[..., 1]
    union = area_p[:, None] + area_g[None, :] - inter
    iou = inter / union
    lt2 = np.minimum(pb[:, None, :2], gb[None, :, :2])
    rb2 = np.maximum(pb[:, None, 2:], gb[None, :, 2:])
    wh2 = np.clip(rb2 - lt2, 0, None)
    area_e = wh2[..., 0] * wh2[..., 1]
    giou = iou - (area_e - union) / area_e
    return cb * cost_bbox + cc * cost_class + cg * (-giou)


if __name__ == "__main__":
    key = jax.random.PRNGKey(0)
    bs, num_queries, num_classes = 2, 8, 8
    k1, k2, k3, k4, k5 = jax.random.split(key, 5)

    pred_logits = 2.0 * jax.random.normal(k1, (bs, num_queries, num_classes), jnp.float32)
    p_cxcy = jax.random.uniform(k2, (bs, num_queries, 2), minval=0.2, maxval=0.8)
    p_wh = jax.random.uniform(k3, (bs, num_queries, 2), minval=0.1, maxval=0.4)
    pred_boxes = jnp.concatenate([p_cxcy, p_wh], axis=-1).astype(jnp.float32)

    sizes = [3, 5]
    annotations = []
    lab_keys = jax.random.split(k4, len(sizes))
    box_keys = jax.random.split(k5, len(sizes))
    for s, lk, bk in zip(sizes, lab_keys, box_keys):
        labels = jax.random.randint(lk, (s,), 0, num_classes)
        bk1, bk2 = jax.random.split(bk)
        g_cxcy = jax.random.uniform(bk1, (s, 2), minval=0.2, maxval=0.8)
        g_wh = jax.random.uniform(bk2, (s, 2), minval=0.1, maxval=0.4)
        boxes = jnp.concatenate([g_cxcy, g_wh], axis=-1).astype(jnp.float32)
        annotations.append({"labels": labels, "boxes": boxes})

    matcher = HungarianMatcher()
    indices, cost_blocks = matcher.forward(pred_logits, pred_boxes, annotations,
                                           return_cost=True)

    # numerical check of the Pallas-computed per-image cost blocks vs NumPy reference
    for i, (anno, s) in enumerate(zip(annotations, sizes)):
        C_ref_i = _reference_cost_np(
            np.asarray(pred_logits[i]),
            np.asarray(pred_boxes[i]),
            np.asarray(anno["labels"]),
            np.asarray(anno["boxes"]),
            matcher.alpha, matcher.gamma,
            matcher.coef_class, matcher.coef_bbox, matcher.coef_giou,
        )
        np.testing.assert_allclose(cost_blocks[i], C_ref_i, rtol=1e-4, atol=1e-4)

    # sanity: each batch element gets min(num_queries, num_targets) matches
    for (ri, cj), s in zip(indices, sizes):
        assert len(ri) == len(cj) == min(num_queries, s)

    print("KERNEL_OK")
</pallas_src>

<mosaic_0001>
module attributes {stable_mosaic.version = 11 : i64} {
  func.func @_cost_kernel(%arg0: i32, %arg1: i32, %arg2: i32, %arg3: memref<1x8x128xf32, #tpu.memory_space<vmem>>, %arg4: memref<1x8x4xf32, #tpu.memory_space<vmem>>, %arg5: memref<1x4x128xf32, #tpu.memory_space<vmem>>, %arg6: memref<1x1x128xi32, #tpu.memory_space<vmem>>, %arg7: memref<1x8x128xf32, #tpu.memory_space<vmem>>) attributes {dimension_semantics = [#tpu.dimension_semantics<parallel>, #tpu.dimension_semantics<parallel>, #tpu.dimension_semantics<parallel>], iteration_bounds = array<i64: 2, 1, 1>, scalar_prefetch = 0 : i64, scratch_operands = 0 : i64, tpu.core_type = #tpu.core_type<tc>, window_params = [{transform_indices = @transform_0, window_bounds = array<i64: 1, 8, 128>}, {transform_indices = @transform_1, window_bounds = array<i64: 1, 8, 4>}, {transform_indices = @transform_2, window_bounds = array<i64: 1, 4, 128>}, {transform_indices = @transform_3, window_bounds = array<i64: 1, 1, 128>}, {transform_indices = @transform_4, window_bounds = array<i64: 1, 8, 128>}]} {
    %c0 = arith.constant 0 : index
    %c0_0 = arith.constant 0 : index
    %c0_1 = arith.constant 0 : index
    %0 = vector.load %arg3[%c0, %c0_0, %c0_1] : memref<1x8x128xf32, #tpu.memory_space<vmem>>, vector<1x8x128xf32>
    %1 = vector.shape_cast %0 : vector<1x8x128xf32> to vector<8x128xf32>
    %2 = math.absf %1 : vector<8x128xf32>
    %cst = arith.constant 0.000000e+00 : f32
    %3 = vector.broadcast %cst : f32 to vector<8x128xf32>
    %4 = arith.subf %3, %1 : vector<8x128xf32>
    %cst_2 = arith.constant 0.000000e+00 : f32
    %5 = vector.broadcast %cst_2 : f32 to vector<8x128xf32>
    %6 = arith.maximumf %4, %5 : vector<8x128xf32>
    %cst_3 = arith.constant 0.000000e+00 : f32
    %7 = vector.broadcast %cst_3 : f32 to vector<8x128xf32>
    %8 = arith.subf %7, %2 : vector<8x128xf32>
    %9 = math.exp %8 : vector<8x128xf32>
    %cst_4 = arith.constant 1.000000e+00 : f32
    %10 = vector.broadcast %cst_4 : f32 to vector<8x128xf32>
    %11 = arith.addf %10, %9 : vector<8x128xf32>
    %12 = math.log %11 : vector<8x128xf32>
    %13 = arith.addf %6, %12 : vector<8x128xf32>
    %14 = arith.addf %1, %13 : vector<8x128xf32>
    %cst_5 = arith.constant 0.000000e+00 : f32
    %15 = vector.broadcast %cst_5 : f32 to vector<8x128xf32>
    %16 = arith.subf %15, %13 : vector<8x128xf32>
    %17 = math.exp %16 : vector<8x128xf32>
    %cst_6 = arith.constant 1.000000e+00 : f32
    %18 = vector.broadcast %cst_6 : f32 to vector<8x128xf32>
    %19 = arith.subf %18, %17 : vector<8x128xf32>
    %20 = arith.mulf %19, %19 : vector<8x128xf32>
    %cst_7 = arith.constant 2.500000e-01 : f32
    %21 = vector.broadcast %cst_7 : f32 to vector<8x128xf32>
    %22 = arith.mulf %21, %20 : vector<8x128xf32>
    %23 = arith.mulf %22, %13 : vector<8x128xf32>
    %24 = arith.mulf %17, %17 : vector<8x128xf32>
    %cst_8 = arith.constant 7.500000e-01 : f32
    %25 = vector.broadcast %cst_8 : f32 to vector<8x128xf32>
    %26 = arith.mulf %25, %24 : vector<8x128xf32>
    %27 = arith.mulf %26, %14 : vector<8x128xf32>
    %28 = arith.subf %23, %27 : vector<8x128xf32>
    %cst_9 = arith.constant 2.000000e+00 : f32
    %29 = vector.broadcast %cst_9 : f32 to vector<8x128xf32>
    %30 = arith.mulf %29, %28 : vector<8x128xf32>
    %c0_10 = arith.constant 0 : index
    %c0_11 = arith.constant 0 : index
    %c0_12 = arith.constant 0 : index
    %31 = vector.load %arg6[%c0_10, %c0_11, %c0_12] : memref<1x1x128xi32, #tpu.memory_space<vmem>>, vector<1x1x128xi32>
    %32 = vector.shape_cast %31 : vector<1x1x128xi32> to vector<1x128xi32>
    %33 = tpu.iota {dimensions = array<i32: 0>} : vector<128x128xi32>
    %34 = vector.broadcast %32 : vector<1x128xi32> to vector<128x128xi32>
    %35 = arith.cmpi eq, %33, %34 : vector<128x128xi32>
    %36 = arith.extui %35 : vector<128x128xi1> to vector<128x128xi32>
    %37 = arith.sitofp %36 : vector<128x128xi32> to vector<128x128xf32>
    %cst_13 = arith.constant dense<0.000000e+00> : vector<8x128xf32>
    %38 = tpu.matmul %30, %37, %cst_13 {dimension_numbers = #tpu.dot_dimension_numbers<[1], [0], [0], [1], [0, 0, 1, 1], [], []>} : vector<8x128xf32>, vector<128x128xf32>, vector<8x128xf32> -> vector<8x128xf32>
    %c0_14 = arith.constant 0 : index
    %c0_15 = arith.constant 0 : index
    %c0_16 = arith.constant 0 : index
    %39 = vector.load %arg4[%c0_14, %c0_15, %c0_16] : memref<1x8x4xf32, #tpu.memory_space<vmem>>, vector<1x8x4xf32>
    %40 = vector.shape_cast %39 : vector<1x8x4xf32> to vector<8x4xf32>
    %c0_17 = arith.constant 0 : index
    %c0_18 = arith.constant 0 : index
    %c0_19 = arith.constant 0 : index
    %41 = vector.load %arg5[%c0_17, %c0_18, %c0_19] : memref<1x4x128xf32, #tpu.memory_space<vmem>>, vector<1x4x128xf32>
    %42 = vector.shape_cast %41 : vector<1x4x128xf32> to vector<4x128xf32>
    %43 = vector.extract_strided_slice %40 {offsets = [0, 0], sizes = [8, 1], strides = [1, 1]} : vector<8x4xf32> to vector<8x1xf32>
    %44 = vector.extract_strided_slice %40 {offsets = [0, 1], sizes = [8, 1], strides = [1, 1]} : vector<8x4xf32> to vector<8x1xf32>
    %45 = vector.extract_strided_slice %40 {offsets = [0, 2], sizes = [8, 1], strides = [1, 1]} : vector<8x4xf32> to vector<8x1xf32>
    %46 = vector.extract_strided_slice %40 {offsets = [0, 3], sizes = [8, 1], strides = [1, 1]} : vector<8x4xf32> to vector<8x1xf32>
    %47 = vector.extract_strided_slice %42 {offsets = [0, 0], sizes = [1, 128], strides = [1, 1]} : vector<4x128xf32> to vector<1x128xf32>
    %48 = vector.extract_strided_slice %42 {offsets = [1, 0], sizes = [1, 128], strides = [1, 1]} : vector<4x128xf32> to vector<1x128xf32>
    %49 = vector.extract_strided_slice %42 {offsets = [2, 0], sizes = [1, 128], strides = [1, 1]} : vector<4x128xf32> to vector<1x128xf32>
    %50 = vector.extract_strided_slice %42 {offsets = [3, 0], sizes = [1, 128], strides = [1, 1]} : vector<4x128xf32> to vector<1x128xf32>
    %cst_20 = arith.constant 5.000000e+00 : f32
    %51 = vector.broadcast %cst_20 : f32 to vector<8x1xf32>
    %52 = arith.mulf %51, %43 : vector<8x1xf32>
    %cst_21 = arith.constant 5.000000e+00 : f32
    %53 = vector.broadcast %cst_21 : f32 to vector<1x128xf32>
    %54 = arith.mulf %53, %47 : vector<1x128xf32>
    %55 = vector.broadcast %52 : vector<8x1xf32> to vector<8x128xf32>
    %56 = vector.broadcast %54 : vector<1x128xf32> to vector<8x128xf32>
    %57 = arith.subf %55, %56 : vector<8x128xf32>
    %58 = math.absf %57 : vector<8x128xf32>
    %cst_22 = arith.constant 5.000000e+00 : f32
    %59 = vector.broadcast %cst_22 : f32 to vector<8x1xf32>
    %60 = arith.mulf %59, %44 : vector<8x1xf32>
    %cst_23 = arith.constant 5.000000e+00 : f32
    %61 = vector.broadcast %cst_23 : f32 to vector<1x128xf32>
    %62 = arith.mulf %61, %48 : vector<1x128xf32>
    %63 = vector.broadcast %60 : vector<8x1xf32> to vector<8x128xf32>
    %64 = vector.broadcast %62 : vector<1x128xf32> to vector<8x128xf32>
    %65 = arith.subf %63, %64 : vector<8x128xf32>
    %66 = math.absf %65 : vector<8x128xf32>
    %67 = arith.addf %58, %66 : vector<8x128xf32>
    %cst_24 = arith.constant 5.000000e+00 : f32
    %68 = vector.broadcast %cst_24 : f32 to vector<8x1xf32>
    %69 = arith.mulf %68, %45 : vector<8x1xf32>
    %cst_25 = arith.constant 5.000000e+00 : f32
    %70 = vector.broadcast %cst_25 : f32 to vector<1x128xf32>
    %71 = arith.mulf %70, %49 : vector<1x128xf32>
    %72 = vector.broadcast %69 : vector<8x1xf32> to vector<8x128xf32>
    %73 = vector.broadcast %71 : vector<1x128xf32> to vector<8x128xf32>
    %74 = arith.subf %72, %73 : vector<8x128xf32>
    %75 = math.absf %74 : vector<8x128xf32>
    %76 = arith.addf %67, %75 : vector<8x128xf32>
    %cst_26 = arith.constant 5.000000e+00 : f32
    %77 = vector.broadcast %cst_26 : f32 to vector<8x1xf32>
    %78 = arith.mulf %77, %46 : vector<8x1xf32>
    %cst_27 = arith.constant 5.000000e+00 : f32
    %79 = vector.broadcast %cst_27 : f32 to vector<1x128xf32>
    %80 = arith.mulf %79, %50 : vector<1x128xf32>
    %81 = vector.broadcast %78 : vector<8x1xf32> to vector<8x128xf32>
    %82 = vector.broadcast %80 : vector<1x128xf32> to vector<8x128xf32>
    %83 = arith.subf %81, %82 : vector<8x128xf32>
    %84 = math.absf %83 : vector<8x128xf32>
    %85 = arith.addf %76, %84 : vector<8x128xf32>
    %cst_28 = arith.constant 5.000000e-01 : f32
    %86 = vector.broadcast %cst_28 : f32 to vector<8x1xf32>
    %87 = arith.mulf %45, %86 : vector<8x1xf32>
    %88 = arith.subf %43, %87 : vector<8x1xf32>
    %cst_29 = arith.constant 5.000000e-01 : f32
    %89 = vector.broadcast %cst_29 : f32 to vector<8x1xf32>
    %90 = arith.mulf %46, %89 : vector<8x1xf32>
    %91 = arith.subf %44, %90 : vector<8x1xf32>
    %cst_30 = arith.constant 5.000000e-01 : f32
    %92 = vector.broadcast %cst_30 : f32 to vector<8x1xf32>
    %93 = arith.mulf %45, %92 : vector<8x1xf32>
    %94 = arith.addf %43, %93 : vector<8x1xf32>
    %cst_31 = arith.constant 5.000000e-01 : f32
    %95 = vector.broadcast %cst_31 : f32 to vector<8x1xf32>
    %96 = arith.mulf %46, %95 : vector<8x1xf32>
    %97 = arith.addf %44, %96 : vector<8x1xf32>
    %cst_32 = arith.constant 5.000000e-01 : f32
    %98 = vector.broadcast %cst_32 : f32 to vector<1x128xf32>
    %99 = arith.mulf %49, %98 : vector<1x128xf32>
    %100 = arith.subf %47, %99 : vector<1x128xf32>
    %cst_33 = arith.constant 5.000000e-01 : f32
    %101 = vector.broadcast %cst_33 : f32 to vector<1x128xf32>
    %102 = arith.mulf %50, %101 : vector<1x128xf32>
    %103 = arith.subf %48, %102 : vector<1x128xf32>
    %cst_34 = arith.constant 5.000000e-01 : f32
    %104 = vector.broadcast %cst_34 : f32 to vector<1x128xf32>
    %105 = arith.mulf %49, %104 : vector<1x128xf32>
    %106 = arith.addf %47, %105 : vector<1x128xf32>
    %cst_35 = arith.constant 5.000000e-01 : f32
    %107 = vector.broadcast %cst_35 : f32 to vector<1x128xf32>
    %108 = arith.mulf %50, %107 : vector<1x128xf32>
    %109 = arith.addf %48, %108 : vector<1x128xf32>
    %110 = arith.mulf %45, %46 : vector<8x1xf32>
    %111 = arith.mulf %49, %50 : vector<1x128xf32>
    %112 = vector.broadcast %94 : vector<8x1xf32> to vector<8x128xf32>
    %113 = vector.broadcast %106 : vector<1x128xf32> to vector<8x128xf32>
    %114 = arith.minimumf %112, %113 : vector<8x128xf32>
    %115 = vector.broadcast %88 : vector<8x1xf32> to vector<8x128xf32>
    %116 = vector.broadcast %100 : vector<1x128xf32> to vector<8x128xf32>
    %117 = arith.maximumf %115, %116 : vector<8x128xf32>
    %118 = arith.subf %114, %117 : vector<8x128xf32>
    %cst_36 = arith.constant 0.000000e+00 : f32
    %119 = vector.broadcast %cst_36 : f32 to vector<8x128xf32>
    %120 = arith.maximumf %118, %119 : vector<8x128xf32>
    %121 = vector.broadcast %97 : vector<8x1xf32> to vector<8x128xf32>
    %122 = vector.broadcast %109 : vector<1x128xf32> to vector<8x128xf32>
    %123 = arith.minimumf %121, %122 : vector<8x128xf32>
    %124 = vector.broadcast %91 : vector<8x1xf32> to vector<8x128xf32>
    %125 = vector.broadcast %103 : vector<1x128xf32> to vector<8x128xf32>
    %126 = arith.maximumf %124, %125 : vector<8x128xf32>
    %127 = arith.subf %123, %126 : vector<8x128xf32>
    %cst_37 = arith.constant 0.000000e+00 : f32
    %128 = vector.broadcast %cst_37 : f32 to vector<8x128xf32>
    %129 = arith.maximumf %127, %128 : vector<8x128xf32>
    %130 = arith.mulf %120, %129 : vector<8x128xf32>
    %131 = vector.broadcast %110 : vector<8x1xf32> to vector<8x128xf32>
    %132 = vector.broadcast %111 : vector<1x128xf32> to vector<8x128xf32>
    %133 = arith.addf %131, %132 : vector<8x128xf32>
    %134 = arith.subf %133, %130 : vector<8x128xf32>
    %135 = vector.broadcast %94 : vector<8x1xf32> to vector<8x128xf32>
    %136 = vector.broadcast %106 : vector<1x128xf32> to vector<8x128xf32>
    %137 = arith.maximumf %135, %136 : vector<8x128xf32>
    %138 = vector.broadcast %88 : vector<8x1xf32> to vector<8x128xf32>
    %139 = vector.broadcast %100 : vector<1x128xf32> to vector<8x128xf32>
    %140 = arith.minimumf %138, %139 : vector<8x128xf32>
    %141 = arith.subf %137, %140 : vector<8x128xf32>
    %142 = vector.broadcast %97 : vector<8x1xf32> to vector<8x128xf32>
    %143 = vector.broadcast %109 : vector<1x128xf32> to vector<8x128xf32>
    %144 = arith.maximumf %142, %143 : vector<8x128xf32>
    %145 = vector.broadcast %91 : vector<8x1xf32> to vector<8x128xf32>
    %146 = vector.broadcast %103 : vector<1x128xf32> to vector<8x128xf32>
    %147 = arith.minimumf %145, %146 : vector<8x128xf32>
    %148 = arith.subf %144, %147 : vector<8x128xf32>
    %149 = arith.mulf %141, %148 : vector<8x128xf32>
    %150 = arith.subf %149, %134 : vector<8x128xf32>
    %151 = arith.mulf %150, %134 : vector<8x128xf32>
    %152 = arith.mulf %130, %149 : vector<8x128xf32>
    %153 = arith.subf %151, %152 : vector<8x128xf32>
    %154 = arith.mulf %134, %149 : vector<8x128xf32>
    %cst_38 = arith.constant 9.99999996E-13 : f32
    %155 = vector.broadcast %cst_38 : f32 to vector<8x128xf32>
    %156 = arith.maximumf %154, %155 : vector<8x128xf32>
    %157 = tpu.reciprocal %156 {approx = true} : vector<8x128xf32> -> vector<8x128xf32>
    %158 = arith.mulf %156, %157 : vector<8x128xf32>
    %cst_39 = arith.constant 2.000000e+00 : f32
    %159 = vector.broadcast %cst_39 : f32 to vector<8x128xf32>
    %160 = arith.subf %159, %158 : vector<8x128xf32>
    %161 = arith.mulf %157, %160 : vector<8x128xf32>
    %cst_40 = arith.constant 2.000000e+00 : f32
    %162 = vector.broadcast %cst_40 : f32 to vector<8x128xf32>
    %163 = arith.mulf %162, %153 : vector<8x128xf32>
    %164 = arith.mulf %163, %161 : vector<8x128xf32>
    %165 = arith.addf %38, %85 : vector<8x128xf32>
    %166 = arith.addf %165, %164 : vector<8x128xf32>
    %c0_41 = arith.constant 0 : index
    %c0_42 = arith.constant 0 : index
    %c0_43 = arith.constant 0 : index
    %167 = vector.load %arg7[%c0_41, %c0_42, %c0_43] : memref<1x8x128xf32, #tpu.memory_space<vmem>>, vector<1x8x128xf32>
    %168 = vector.shape_cast %167 : vector<1x8x128xf32> to vector<8x128xf32>
    %169 = vector.shape_cast %166 : vector<8x128xf32> to vector<1x8x128xf32>
    tpu.vector_store %arg7[%c0_41, %c0_42, %c0_43], %169 {strides = array<i32>} : memref<1x8x128xf32, #tpu.memory_space<vmem>>, vector<1x8x128xf32>,
    return
  }
  func.func @transform_0(%arg0: i32, %arg1: i32, %arg2: i32) -> (i32, i32, i32) {
    %c0_i32 = arith.constant 0 : i32
    %c0_i32_0 = arith.constant 0 : i32
    return %arg0, %arg1, %c0_i32 : i32, i32, i32
  }
  func.func @transform_1(%arg0: i32, %arg1: i32, %arg2: i32) -> (i32, i32, i32) {
    %c0_i32 = arith.constant 0 : i32
    %c0_i32_0 = arith.constant 0 : i32
    return %arg0, %arg1, %c0_i32 : i32, i32, i32
  }
  func.func @transform_2(%arg0: i32, %arg1: i32, %arg2: i32) -> (i32, i32, i32) {
    %c0_i32 = arith.constant 0 : i32
    %c0_i32_0 = arith.constant 0 : i32
    return %arg0, %c0_i32, %arg2 : i32, i32, i32
  }
  func.func @transform_3(%arg0: i32, %arg1: i32, %arg2: i32) -> (i32, i32, i32) {
    %c0_i32 = arith.constant 0 : i32
    %c0_i32_0 = arith.constant 0 : i32
    return %arg0, %c0_i32, %arg2 : i32, i32, i32
  }
  func.func @transform_4(%arg0: i32, %arg1: i32, %arg2: i32) -> (i32, i32, i32) {
    %c0_i32 = arith.constant 0 : i32
    return %arg0, %arg1, %arg2 : i32, i32, i32
  }
}

</mosaic_0001>

<llo_original>
// kernel: tpu_custom_call.1
$region0: #{tpu_custom_call.1}
  #allocation0 [shape = 'u32[]', space=smem, size = 0x4, offset = 0x4, fixed_abs, tag = 'smem constant byte address 0x4 - core index']
  #allocation1 [shape = 'u32[144,128]{1,0:T(1,128)}', space=vmem, size = 0x12000, scoped, tag = 'internal scratch']
  %s0 = inlined_call_operand.vmem [shape: f32[2,8,128], index: 0, kind: input, shape index: {}]
  %s1 = inlined_call_operand.vmem [shape: f32[2,8,4], index: 1, kind: input, shape index: {}]
  %s2 = inlined_call_operand.vmem [shape: f32[2,4,128], index: 2, kind: input, shape index: {}]
  %s3 = inlined_call_operand.vmem [shape: s32[2,1,128], index: 3, kind: input, shape index: {}]
  %s4 = inlined_call_operand.hbm [shape: f32[2,8,128], index: 4, kind: output, shape index: {}]
  %s5 = sld [smem:[#allocation0]]
  $region49: #{tpu_custom_call.1} parent=0
    _
  %s7 = ssub.s32 1, %s5
  %s8 = scalar_select 0, %s7, %s5
  $region1: #{tpu_custom_call.1} parent=0
    #allocation2 [shape = 'u8[8192]{0}', space=vmem, size = 0x2000, scoped, tag = 'output window, operand 0']
    #allocation3 [shape = 's32[2]{0}', space=sflag, size = 0x8, scoped, tag = 'scoped memory for tpu_custom_call.1']
    %9 = vsyncpa [#allocation3], 0
    %s10 = scalar_lea.sflag [#allocation3], 1
    %11 = vsyncpa %s10, 0
    loop: start=0, step=1, limit=4
    $region2: #{tpu_custom_call.1} parent=1 // loop_pre_header
      _
    $region3: #{tpu_custom_call.1} parent=1 // loop_header
      %s13 = sphi 0, %s17
      %p14 = scmp.ge.s32.totalorder %s13, 4
      %s20 = sphi 0, %s39
      %s21 = sphi 0, %s35
      %s22 = sphi 0, %s31
      %s23 = sphi 0, %s20
      %s24 = sphi 0, %s21
      %s25 = sphi 0, %s22
      %s26 = sphi 0, %s23
      %s27 = sphi 0, %s24
      %s28 = sphi 0, %s25
      %s44 = sphi 0, %s46
      %s47 = sphi 0, %s44
      %s48 = sphi 0, %s47
      %s64 = sphi 0, %s48
      %s72 = sphi 0, %s74
      %s75 = sphi 0, %s72
      %s76 = sphi 0, %s75
      %s92 = sphi 0, %s76
      %s100 = sphi 0, %s102
      %s103 = sphi 0, %s100
      %s104 = sphi 0, %s103
      %s120 = sphi 0, %s104
      %s128 = sphi 0, %s130
      %s131 = sphi 0, %s128
      %s132 = sphi 0, %s131
      %s148 = sphi 0, %s132
      %s158 = sphi 0, %s160
      %s161 = sphi 0, %s158
      %s162 = sphi 0, %s161
      %s178 = sphi 0, %s162
    $region4: #{tpu_custom_call.1} parent=1 // loop_header_branch
      %16 = sbr.rel (%p14) target = $region8
    $region5: #{tpu_custom_call.1} parent=1 // loop_body
      %s18 = ssub.s32 %s13, 1
      %s19 = ssub.s32 %s13, 2
      %s29 = sadd.s32 1, %s22
      %p30 = scmp.ge.s32.totalorder %s29, 1
      %s31 = scalar_select %p30, 0, %s29
      %s32 = sadd.s32 1, %s21
      %s33 = scalar_select %p30, %s32, %s21
      %p34 = scmp.ge.s32.totalorder %s33, 1
      %s35 = scalar_select %p34, 0, %s33
      %s36 = sadd.s32 1, %s20
      %s37 = scalar_select %p34, %s36, %s20
      %p38 = scmp.ge.s32.totalorder %s37, 2
      %s39 = scalar_select %p38, 0, %s37
      %s40 = ssub.s32 %s20, %s39
      %s41 = ssub.s32 %s21, %s35
      %s42 = sor.u32 %s40, %s41
      %p43 = scmp.eq.s32.totalorder %s42, 0
      %s45 = sadd.s32 %s44, 1
      %s46 = scalar_select %p43, %s44, %s45
      %p49 = pneg %p43
      %p50 = scmp.eq.s32.totalorder %s13, 1
      %p51 = por %p49, %p50
      %p52 = scmp.ne.s32.totalorder %s44, %s47
      %p53 = scmp.eq.s32.totalorder %s13, 0
      %p54 = por %p52, %p53
      %p55 = scmp.ne.s32.totalorder %s44, %s47
      %p56 = scmp.eq.s32.totalorder %s18, 1
      %p57 = por %p55, %p56
      %p58 = scmp.ne.s32.totalorder %s47, %s48
      %p59 = scmp.eq.s32.totalorder %s18, 0
      %p60 = por %p58, %p59
      %p61 = scmp.ne.s32.totalorder %s47, %s48
      %p62 = scmp.eq.s32.totalorder %s19, 1
      %p63 = por %p61, %p62
      %p65 = scmp.ne.s32.totalorder %s48, %s64
      %p66 = scmp.eq.s32.totalorder %s19, 0
      %p67 = por %p65, %p66
      %s68 = ssub.s32 %s20, %s39
      %s69 = ssub.s32 %s21, %s35
      %s70 = sor.u32 %s68, %s69
      %p71 = scmp.eq.s32.totalorder %s70, 0
      %s73 = sadd.s32 %s72, 1
      %s74 = scalar_select %p71, %s72, %s73
      %p77 = pneg %p71
      %p78 = scmp.eq.s32.totalorder %s13, 1
      %p79 = por %p77, %p78
      %p80 = scmp.ne.s32.totalorder %s72, %s75
      %p81 = scmp.eq.s32.totalorder %s13, 0
      %p82 = por %p80, %p81
      %p83 = scmp.ne.s32.totalorder %s72, %s75
      %p84 = scmp.eq.s32.totalorder %s18, 1
      %p85 = por %p83, %p84
      %p86 = scmp.ne.s32.totalorder %s75, %s76
      %p87 = scmp.eq.s32.totalorder %s18, 0
      %p88 = por %p86, %p87
      %p89 = scmp.ne.s32.totalorder %s75, %s76
      %p90 = scmp.eq.s32.totalorder %s19, 1
      %p91 = por %p89, %p90
      %p93 = scmp.ne.s32.totalorder %s76, %s92
      %p94 = scmp.eq.s32.totalorder %s19, 0
      %p95 = por %p93, %p94
      %s96 = ssub.s32 %s20, %s39
      %s97 = ssub.s32 %s22, %s31
      %s98 = sor.u32 %s96, %s97
      %p99 = scmp.eq.s32.totalorder %s98, 0
      %s101 = sadd.s32 %s100, 1
      %s102 = scalar_select %p99, %s100, %s101
      %p105 = pneg %p99
      %p106 = scmp.eq.s32.totalorder %s13, 1
      %p107 = por %p105, %p106
      %p108 = scmp.ne.s32.totalorder %s100, %s103
      %p109 = scmp.eq.s32.totalorder %s13, 0
      %p110 = por %p108, %p109
      %p111 = scmp.ne.s32.totalorder %s100, %s103
      %p112 = scmp.eq.s32.totalorder %s18, 1
      %p113 = por %p111, %p112
      %p114 = scmp.ne.s32.totalorder %s103, %s104
      %p115 = scmp.eq.s32.totalorder %s18, 0
      %p116 = por %p114, %p115
      %p117 = scmp.ne.s32.totalorder %s103, %s104
      %p118 = scmp.eq.s32.totalorder %s19, 1
      %p119 = por %p117, %p118
      %p121 = scmp.ne.s32.totalorder %s104, %s120
      %p122 = scmp.eq.s32.totalorder %s19, 0
      %p123 = por %p121, %p122
      %s124 = ssub.s32 %s20, %s39
      %s125 = ssub.s32 %s22, %s31
      %s126 = sor.u32 %s124, %s125
      %p127 = scmp.eq.s32.totalorder %s126, 0
      %s129 = sadd.s32 %s128, 1
      %s130 = scalar_select %p127, %s128, %s129
      %p133 = pneg %p127
      %p134 = scmp.eq.s32.totalorder %s13, 1
      %p135 = por %p133, %p134
      %p136 = scmp.ne.s32.totalorder %s128, %s131
      %p137 = scmp.eq.s32.totalorder %s13, 0
      %p138 = por %p136, %p137
      %p139 = scmp.ne.s32.totalorder %s128, %s131
      %p140 = scmp.eq.s32.totalorder %s18, 1
      %p141 = por %p139, %p140
      %p142 = scmp.ne.s32.totalorder %s131, %s132
      %p143 = scmp.eq.s32.totalorder %s18, 0
      %p144 = por %p142, %p143
      %p145 = scmp.ne.s32.totalorder %s131, %s132
      %p146 = scmp.eq.s32.totalorder %s19, 1
      %p147 = por %p145, %p146
      %p149 = scmp.ne.s32.totalorder %s132, %s148
      %p150 = scmp.eq.s32.totalorder %s19, 0
      %p151 = por %p149, %p150
      %s152 = ssub.s32 %s20, %s39
      %s153 = ssub.s32 %s21, %s35
      %s154 = sor.u32 %s152, %s153
      %s155 = ssub.s32 %s22, %s31
      %s156 = sor.u32 %s154, %s155
      %p157 = scmp.eq.s32.totalorder %s156, 0
      %s159 = sadd.s32 %s158, 1
      %s160 = scalar_select %p157, %s158, %s159
      %p163 = pneg %p157
      %p164 = scmp.eq.s32.totalorder %s13, 1
      %p165 = por %p163, %p164
      %p166 = scmp.ne.s32.totalorder %s158, %s161
      %p167 = scmp.eq.s32.totalorder %s13, 0
      %p168 = por %p166, %p167
      %p169 = scmp.ne.s32.totalorder %s158, %s161
      %p170 = scmp.eq.s32.totalorder %s18, 1
      %p171 = por %p169, %p170
      %p172 = scmp.ne.s32.totalorder %s161, %s162
      %p173 = scmp.eq.s32.totalorder %s18, 0
      %p174 = por %p172, %p173
      %p175 = scmp.ne.s32.totalorder %s161, %s162
      %p176 = scmp.eq.s32.totalorder %s19, 1
      %p177 = por %p175, %p176
      %p179 = scmp.ne.s32.totalorder %s162, %s178
      %p180 = scmp.eq.s32.totalorder %s19, 0
      %p181 = por %p179, %p180
      %p182 = scmp.le.s32.totalorder 1, %s13
      %p183 = scmp.lt.s32.totalorder %s13, 3
      %p184 = pnand %p182, %p183
      %p185 = pneg %p184
      // Predicated region
      $region9: #{tpu_custom_call.1} parent=5 // pred_check
        _
      $region10: #{tpu_custom_call.1} parent=5 // pred_check_branch
        %187 = sbr.rel (%p184) target = $region12
      $region11: #{tpu_custom_call.1} parent=5 // pred_region
        %s188 = ssub.s32 %s13, 1
      $region12: #{tpu_custom_call.1} parent=5 // pred_fallthru
        _
      %p189 = scmp.lt.s32.totalorder %s13, 2
      // Predicated region
      $region13: #{tpu_custom_call.1} parent=5 // pred_check
        %p190 = pneg %p189
      $region14: #{tpu_custom_call.1} parent=5 // pred_check_branch
        %192 = sbr.rel (%p190) target = $region16
      $region15: #{tpu_custom_call.1} parent=5 // pred_region
        // Predicated region
        $region17: #{tpu_custom_call.1} parent=15 // pred_check
          %p193 = pneg %p54
        $region18: #{tpu_custom_call.1} parent=15 // pred_check_branch
          %195 = sbr.rel (%p193) target = $region20
        $region19: #{tpu_custom_call.1} parent=15 // pred_region
          %p196 = scmp.lt.s32.totalorder %s20, 1
          %s197 = scalar_select %p196, %s20, 1
          %p198 = scmp.lt.s32.totalorder %s21, 0
          %s199 = scalar_select %p198, %s21, 0
          %s200 = sadd.s32 %s199, %s197
          %s201 = smul.addr %s200, 8
          %s202 = scalar_lea.vmem %s0, %s201
        $region20: #{tpu_custom_call.1} parent=15 // pred_fallthru
          _
        // Predicated region
        $region21: #{tpu_custom_call.1} parent=15 // pred_check
          %p203 = pneg %p82
        $region22: #{tpu_custom_call.1} parent=15 // pred_check_branch
          %205 = sbr.rel (%p203) target = $region24
        $region23: #{tpu_custom_call.1} parent=15 // pred_region
          %p206 = scmp.lt.s32.totalorder %s20, 1
          %s207 = scalar_select %p206, %s20, 1
          %p208 = scmp.lt.s32.totalorder %s21, 0
          %s209 = scalar_select %p208, %s21, 0
          %s210 = sadd.s32 %s209, %s207
          %s211 = smul.addr %s210, 8
          %s212 = scalar_lea.vmem %s1, %s211
        $region24: #{tpu_custom_call.1} parent=15 // pred_fallthru
          _
        // Predicated region
        $region25: #{tpu_custom_call.1} parent=15 // pred_check
          %p213 = pneg %p110
        $region26: #{tpu_custom_call.1} parent=15 // pred_check_branch
          %215 = sbr.rel (%p213) target = $region28
        $region27: #{tpu_custom_call.1} parent=15 // pred_region
          %p216 = scmp.lt.s32.totalorder %s20, 1
          %s217 = scalar_select %p216, %s20, 1
          %p218 = scmp.lt.s32.totalorder %s22, 0
          %s219 = scalar_select %p218, %s22, 0
          %s220 = sadd.s32 %s219, %s217
          %s221 = smul.addr %s220, 4
          %s222 = scalar_lea.vmem %s2, %s221
        $region28: #{tpu_custom_call.1} parent=15 // pred_fallthru
          _
        // Predicated region
        $region29: #{tpu_custom_call.1} parent=15 // pred_check
          %p223 = pneg %p138
        $region30: #{tpu_custom_call.1} parent=15 // pred_check_branch
          %225 = sbr.rel (%p223) target = $region32
        $region31: #{tpu_custom_call.1} parent=15 // pred_region
          %p226 = scmp.lt.s32.totalorder %s20, 1
          %s227 = scalar_select %p226, %s20, 1
          %p228 = scmp.lt.s32.totalorder %s22, 0
          %s229 = scalar_select %p228, %s22, 0
          %s230 = sadd.s32 %s229, %s227
          %s231 = scalar_lea.vmem %s3, %s230
        $region32: #{tpu_custom_call.1} parent=15 // pred_fallthru
          _
      $region16: #{tpu_custom_call.1} parent=5 // pred_fallthru
        _
      %p232 = scmp.le.s32.totalorder 1, %s13
      %p233 = scmp.lt.s32.totalorder %s13, 3
      %p234 = pnand %p232, %p233
      %p235 = pneg %p234
      // Predicated region
      $region33: #{tpu_custom_call.1} parent=5 // pred_check
        _
      $region34: #{tpu_custom_call.1} parent=5 // pred_check_branch
        %237 = sbr.rel (%p234) target = $region36
      $region35: #{tpu_custom_call.1} parent=5 // pred_region
        %s238 = ssub.s32 %s13, 1
        %p239 = scmp.lt.s32.totalorder %s23, 1
        %s240 = scalar_select %p239, %s23, 1
        %p241 = scmp.lt.s32.totalorder %s24, 0
        %s242 = scalar_select %p241, %s24, 0
        %s243 = sadd.s32 %s242, %s240
        %s244 = smul.addr %s243, 8
        %s245 = scalar_lea.vmem %s0, %s244
        %p246 = pneg %p60
        %p247 = pneg %p57
        %p248 = scmp.lt.s32.totalorder %s23, 1
        %s249 = scalar_select %p248, %s23, 1
        %p250 = scmp.lt.s32.totalorder %s24, 0
        %s251 = scalar_select %p250, %s24, 0
        %s252 = sadd.s32 %s251, %s249
        %s253 = smul.addr %s252, 8
        %s254 = scalar_lea.vmem %s1, %s253
        %p255 = pneg %p88
        %p256 = pneg %p85
        %p257 = scmp.lt.s32.totalorder %s23, 1
        %s258 = scalar_select %p257, %s23, 1
        %p259 = scmp.lt.s32.totalorder %s25, 0
        %s260 = scalar_select %p259, %s25, 0
        %s261 = sadd.s32 %s260, %s258
        %s262 = smul.addr %s261, 4
        %s263 = scalar_lea.vmem %s2, %s262
        %p264 = pneg %p116
        %p265 = pneg %p113
        %p266 = scmp.lt.s32.totalorder %s23, 1
        %s267 = scalar_select %p266, %s23, 1
        %p268 = scmp.lt.s32.totalorder %s25, 0
        %s269 = scalar_select %p268, %s25, 0
        %s270 = sadd.s32 %s269, %s267
        %s271 = scalar_lea.vmem %s3, %s270
        %p272 = pneg %p144
        %p273 = pneg %p141
        %p274 = pneg %p174
        %p275 = pneg %p171
        %s276 = sand.u32 %s161, 1
        %s277 = scalar_lea.sflag [#allocation3], %s276
        %s278 = sand.u32 %s161, 1
        %s279 = smul.addr %s278, 8
        %s280 = scalar_lea.vmem [#allocation2], %s279
        %p281 = scmp.lt.s32.totalorder %s23, 1
        %s282 = scalar_select %p281, %s23, 1
        %p283 = scmp.lt.s32.totalorder %s24, 0
        %s284 = scalar_select %p283, %s24, 0
        %s285 = sadd.s32 %s284, %s282
        %s286 = smul.addr %s285, 8
        %s287 = scalar_lea.vmem %s0, %s286
        %p288 = scmp.lt.s32.totalorder %s23, 1
        %s289 = scalar_select %p288, %s23, 1
        %p290 = scmp.lt.s32.totalorder %s24, 0
        %s291 = scalar_select %p290, %s24, 0
        %s292 = sadd.s32 %s291, %s289
        %s293 = smul.addr %s292, 8
        %s294 = scalar_lea.vmem %s1, %s293
        %p295 = scmp.lt.s32.totalorder %s23, 1
        %s296 = scalar_select %p295, %s23, 1
        %p297 = scmp.lt.s32.totalorder %s25, 0
        %s298 = scalar_select %p297, %s25, 0
        %s299 = sadd.s32 %s298, %s296
        %s300 = smul.addr %s299, 4
        %s301 = scalar_lea.vmem %s2, %s300
        %p302 = scmp.lt.s32.totalorder %s23, 1
        %s303 = scalar_select %p302, %s23, 1
        %p304 = scmp.lt.s32.totalorder %s25, 0
        %s305 = scalar_select %p304, %s25, 0
        %s306 = sadd.s32 %s305, %s303
        %s307 = scalar_lea.vmem %s3, %s306
        %v308 = vld [vmem:[%s287] sm:$0xff]
        %v309 = vand.u32 2147483647, %v308
        %v310 = vsub.f32 0.0, %v308
        %v311 = vmax.f32 %v310, 0.0
        %v312 = vsub.f32 0.0, %v309
        %v313 = vmul.f32 %v312, 1.442695
        %v314 = vpow.pop %v313
        %v315 = vadd.f32 %v314, 1.0
        %v316 = vlog2.pop %v315
        %v317 = vmul.f32 %v316, 0.6931472
        %v318 = vadd.f32 %v311, %v317
        %v319 = vadd.f32 %v308, %v318
        %v320 = vsub.f32 0.0, %v318
        %v321 = vmul.f32 %v320, 1.442695
        %v322 = vpow.pop %v321
        %v323 = vsub.f32 1.0, %v322
        %v324 = vmul.f32 %v323, %v323
        %v325 = vmul.f32 %v324, 0.25
        %v326 = vmul.f32 %v325, %v318
        %v327 = vmul.f32 %v322, %v322
        %v328 = vmul.f32 %v327, 0.75
        %v329 = vmul.f32 %v328, %v319
        %v330 = vsub.f32 %v326, %v329
        %v331 = vmul.f32 %v330, 2.0
        %v332 = vld [vmem:[%s307] sm:$0x1]
        %v333 = vlaneseq
        %v334 = vshrl.u32 %v333, 7
        %v335 = vadd.s32 %v334, 8
        %v336 = vadd.s32 %v334, 16
        %v337 = vadd.s32 %v334, 24
        %v338 = vadd.s32 %v334, 32
        %v339 = vadd.s32 %v334, 40
        %v340 = vadd.s32 %v334, 48
        %v341 = vadd.s32 %v334, 56
        %v342 = vadd.s32 %v334, 64
        %v343 = vadd.s32 %v334, 72
        %v344 = vadd.s32 %v334, 80
        %v345 = vadd.s32 %v334, 88
        %v346 = vadd.s32 %v334, 96
        %v347 = vadd.s32 %v334, 104
        %v348 = vadd.s32 %v334, 112
        %v349 = vadd.s32 %v334, 120
        %v350 = vlaneseq
        %v351 = vshrl.u32 %v350, 7
        %v352 = vsub.s32 0, %v351
        %v353 = vrot.slane %v332, %v352
        %vm354 = vcmp.eq.s32.totalorder %v334, %v353
        %vm355 = vcmp.eq.s32.totalorder %v335, %v353
        %vm356 = vcmp.eq.s32.totalorder %v336, %v353
        %vm357 = vcmp.eq.s32.totalorder %v337, %v353
        %vm358 = vcmp.eq.s32.totalorder %v338, %v353
        %vm359 = vcmp.eq.s32.totalorder %v339, %v353
        %vm360 = vcmp.eq.s32.totalorder %v340, %v353
        %vm361 = vcmp.eq.s32.totalorder %v341, %v353
        %vm362 = vcmp.eq.s32.totalorder %v342, %v353
        %vm363 = vcmp.eq.s32.totalorder %v343, %v353
        %vm364 = vcmp.eq.s32.totalorder %v344, %v353
        %vm365 = vcmp.eq.s32.totalorder %v345, %v353
        %vm366 = vcmp.eq.s32.totalorder %v346, %v353
        %vm367 = vcmp.eq.s32.totalorder %v347, %v353
        %vm368 = vcmp.eq.s32.totalorder %v348, %v353
        %vm369 = vcmp.eq.s32.totalorder %v349, %v353
        %v370 = vsel %vm354, 1, 0
        %v371 = vsel %vm355, 1, 0
        %v372 = vsel %vm356, 1, 0
        %v373 = vsel %vm357, 1, 0
        %v374 = vsel %vm358, 1, 0
        %v375 = vsel %vm359, 1, 0
        %v376 = vsel %vm360, 1, 0
        %v377 = vsel %vm361, 1, 0
        %v378 = vsel %vm362, 1, 0
        %v379 = vsel %vm363, 1, 0
        %v380 = vsel %vm364, 1, 0
        %v381 = vsel %vm365, 1, 0
        %v382 = vsel %vm366, 1, 0
        %v383 = vsel %vm367, 1, 0
        %v384 = vsel %vm368, 1, 0
        %v385 = vsel %vm369, 1, 0
        %v386 = vcvt.s32.f32 %v370
        %v387 = vcvt.s32.f32 %v371
        %v388 = vcvt.s32.f32 %v372
        %v389 = vcvt.s32.f32 %v373
        %v390 = vcvt.s32.f32 %v374
        %v391 = vcvt.s32.f32 %v375
        %v392 = vcvt.s32.f32 %v376
        %v393 = vcvt.s32.f32 %v377
        %v394 = vcvt.s32.f32 %v378
        %v395 = vcvt.s32.f32 %v379
        %v396 = vcvt.s32.f32 %v380
        %v397 = vcvt.s32.f32 %v381
        %v398 = vcvt.s32.f32 %v382
        %v399 = vcvt.s32.f32 %v383
        %v400 = vcvt.s32.f32 %v384
        %v401 = vcvt.s32.f32 %v385
        %v402 = vld [vmem:[%s294] sm:$0xff]
        %v403 = vld [vmem:[%s301] sm:$0xf]
        %v404 = vmul.f32 %v402, 5.0
        %v405 = vmul.f32 %v403, 5.0
        %407 = vset.pattern.permute.xlu0 0
        %408 = vperm.xlu0 %407, %v404
        %v409 = vpop.permute.xlu0 %408
        %v411 = vlaneseq
        %v412 = vshrl.u32 %v411, 7
        %v413 = vsub.s32 0, %v412
        %v414 = vrot.slane %v405, %v413
        %v415 = vsub.f32 %v409, %v414
        %v416 = vand.u32 2147483647, %v415
        %417 = vset.pattern.permute.xlu0 1
        %418 = vperm.xlu0 %417, %v404
        %v419 = vpop.permute.xlu0 %418
        %v421 = vlaneseq
        %v422 = vshrl.u32 %v421, 7
        %v423 = vsub.s32 1, %v422
        %v424 = vrot.slane %v405, %v423
        %v425 = vsub.f32 %v419, %v424
        %v426 = vand.u32 2147483647, %v425
        %v427 = vadd.f32 %v416, %v426
        %428 = vset.pattern.permute.xlu0 2
        %429 = vperm.xlu0 %428, %v404
        %v430 = vpop.permute.xlu0 %429
        %v432 = vlaneseq
        %v433 = vshrl.u32 %v432, 7
        %v434 = vsub.s32 2, %v433
        %v435 = vrot.slane %v405, %v434
        %v436 = vsub.f32 %v430, %v435
        %v437 = vand.u32 2147483647, %v436
        %v438 = vadd.f32 %v427, %v437
        %439 = vset.pattern.permute.xlu0 3
        %440 = vperm.xlu0 %439, %v404
        %v441 = vpop.permute.xlu0 %440
        %v443 = vlaneseq
        %v444 = vshrl.u32 %v443, 7
        %v445 = vsub.s32 3, %v444
        %v446 = vrot.slane %v405, %v445
        %v447 = vsub.f32 %v441, %v446
        %v448 = vand.u32 2147483647, %v447
        %v449 = vadd.f32 %v438, %v448
        %v450 = vmul.f32 %v402, 0.5
        %452 = vrot.lane.b32.xlu0 %v450, 126
        %v453 = vpop.permute.xlu0 %452
        %v455 = vsub.f32 %v402, %v453
        %v456 = vadd.f32 %v402, %v453
        %v457 = vmul.f32 %v403, 0.5
        %v459 = vrot.slane %v457, 2
        %v461 = vsub.f32 %v403, %v459
        %v462 = vadd.f32 %v403, %v459
        %464 = vrot.lane.b32.xlu0 %v402, 127
        %v465 = vpop.permute.xlu0 %464
        %v467 = vmul.f32 %v402, %v465
        %v469 = vrot.slane %v403, 1
        %v471 = vmul.f32 %v403, %v469
        %473 = vset.pattern.permute.xlu0 0
        %474 = vperm.xlu0 %473, %v456
        %v475 = vpop.permute.xlu0 %474
        %v477 = vlaneseq
        %v478 = vshrl.u32 %v477, 7
        %v479 = vsub.s32 0, %v478
        %v480 = vrot.slane %v462, %v479
        %v481 = vmin.f32 %v475, %v480
        %483 = vset.pattern.permute.xlu0 0
        %484 = vperm.xlu0 %483, %v455
        %v485 = vpop.permute.xlu0 %484
        %v487 = vlaneseq
        %v488 = vshrl.u32 %v487, 7
        %v489 = vsub.s32 0, %v488
        %v490 = vrot.slane %v461, %v489
        %v491 = vmax.f32 %v485, %v490
        %v492 = vsub.f32 %v481, %v491
        %v493 = vmax.f32 %v492, 0.0
        %494 = vset.pattern.permute.xlu0 1
        %495 = vperm.xlu0 %494, %v456
        %v496 = vpop.permute.xlu0 %495
        %v498 = vlaneseq
        %v499 = vshrl.u32 %v498, 7
        %v500 = vsub.s32 1, %v499
        %v501 = vrot.slane %v462, %v500
        %v502 = vmin.f32 %v496, %v501
        %503 = vset.pattern.permute.xlu0 1
        %504 = vperm.xlu0 %503, %v455
        %v505 = vpop.permute.xlu0 %504
        %v507 = vlaneseq
        %v508 = vshrl.u32 %v507, 7
        %v509 = vsub.s32 1, %v508
        %v510 = vrot.slane %v461, %v509
        %v511 = vmax.f32 %v505, %v510
        %v512 = vsub.f32 %v502, %v511
        %v513 = vmax.f32 %v512, 0.0
        %v514 = vmul.f32 %v493, %v513
        %516 = vset.pattern.permute.xlu0 2
        %517 = vperm.xlu0 %516, %v467
        %v518 = vpop.permute.xlu0 %517
        %v520 = vlaneseq
        %v521 = vshrl.u32 %v520, 7
        %v522 = vsub.s32 2, %v521
        %v523 = vrot.slane %v471, %v522
        %v524 = vadd.f32 %v518, %v523
        %v525 = vsub.f32 %v524, %v514
        %v526 = vmax.f32 %v475, %v480
        %v527 = vmin.f32 %v485, %v490
        %v528 = vsub.f32 %v526, %v527
        %v529 = vmax.f32 %v496, %v501
        %v530 = vmin.f32 %v505, %v510
        %v531 = vsub.f32 %v529, %v530
        %v532 = vmul.f32 %v528, %v531
        %v533 = vsub.f32 %v532, %v525
        %v534 = vmul.f32 %v533, %v525
        %v535 = vmul.f32 %v514, %v532
        %v536 = vsub.f32 %v534, %v535
        %v537 = vmul.f32 %v525, %v532
        %v538 = vmax.f32 %v537, 1e-12
        %v539 = vrcp.pop %v538
        %v540 = vmul.f32 %v538, %v539
        %v541 = vsub.f32 2.0, %v540
        %v542 = vmul.f32 %v539, %v541
        %v543 = vmul.f32 %v536, 2.0
        %v544 = vmul.f32 %v543, %v542
        %545 = vmatprep.subr.mxu0 0.0
        %546 = vmatpush1.msra.mxu0 %v386
        %547 = vmatprep.subr.mxu0 0.0
        %548 = vmatpush1.msra.mxu0 %v387
        %549 = vmatprep.subr.mxu0 0.0
        %550 = vmatpush1.msra.mxu0 %v388
        %551 = vmatprep.subr.mxu0 0.0
        %552 = vmatpush1.msra.mxu0 %v389
        %553 = vmatprep.subr.mxu0 0.0
        %554 = vmatpush1.msra.mxu0 %v390
        %555 = vmatprep.subr.mxu0 0.0
        %556 = vmatpush1.msra.mxu0 %v391
        %557 = vmatprep.subr.mxu0 0.0
        %558 = vmatpush1.msra.mxu0 %v392
        %559 = vmatprep.subr.mxu0 0.0
        %560 = vmatpush1.msra.mxu0 %v393
        %561 = vmatprep.subr.mxu0 0.0
        %562 = vmatpush1.msra.mxu0 %v394
        %563 = vmatprep.subr.mxu0 0.0
        %564 = vmatpush1.msra.mxu0 %v395
        %565 = vmatprep.subr.mxu0 0.0
        %566 = vmatpush1.msra.mxu0 %v396
        %567 = vmatprep.subr.mxu0 0.0
        %568 = vmatpush1.msra.mxu0 %v397
        %569 = vmatprep.subr.mxu0 0.0
        %570 = vmatpush1.msra.mxu0 %v398
        %571 = vmatprep.subr.mxu0 0.0
        %572 = vmatpush1.msra.mxu0 %v399
        %573 = vmatprep.subr.mxu0 0.0
        %574 = vmatpush1.msra.mxu0 %v400
        %575 = vmatprep.subr.mxu0 0.0
        %576 = vmatpush1.msra.mxu0 %v401
        %577 = vmatprep.subr.mxu0 0.0
        %578 = vmatpush1.msra.mxu0 0.0
        %579 = vmatprep.subr.mxu0 0.0
        %580 = vmatpush1.msra.mxu0 0.0
        %581 = vmatprep.subr.mxu0 0.0
        %582 = vmatpush1.msra.mxu0 0.0
        %583 = vmatprep.subr.mxu0 0.0
        %584 = vmatpush1.msra.mxu0 0.0
        %585 = vmatprep.subr.mxu0 0.0
        %586 = vmatpush1.msra.mxu0 0.0
        %587 = vmatprep.subr.mxu0 0.0
        %588 = vmatpush1.msra.mxu0 0.0
        %589 = vmatprep.subr.mxu0 0.0
        %590 = vmatpush1.msra.mxu0 0.0
        %591 = vmatprep.subr.mxu0 0.0
        %592 = vmatpush1.msra.mxu0 0.0
        %593 = vmatprep.subr.mxu0 0.0
        %594 = vmatpush1.msra.mxu0 0.0
        %595 = vmatprep.subr.mxu0 0.0
        %596 = vmatpush1.msra.mxu0 0.0
        %597 = vmatprep.subr.mxu0 0.0
        %598 = vmatpush1.msra.mxu0 0.0
        %599 = vmatprep.subr.mxu0 0.0
        %600 = vmatpush1.msra.mxu0 0.0
        %601 = vmatprep.subr.mxu0 0.0
        %602 = vmatpush1.msra.mxu0 0.0
        %603 = vmatprep.subr.mxu0 0.0
        %604 = vmatpush1.msra.mxu0 0.0
        %605 = vmatprep.subr.mxu0 0.0
        %606 = vmatpush1.msra.mxu0 0.0
        %607 = vmatprep.subr.mxu0 0.0
        %608 = vmatpush1.msra.mxu0 0.0
        %609 = vmatprep.mubr.f32.mxu0 0.0
        %610 = vmatmul.mubr.f32.gmra.mrb[0].mxu0 %v331
        %v611 = vpop.f32.mrb[0].mxu0
        %v612 = vadd.f32 %v449, %v611
        %v613 = vpop.f32.mrb[0].mxu0
        %614 = vdwg.mxu0
        %v615 = vadd.f32 %v612, %v544
        %616 = vst [vmem:[%s280] sm:$0xff] %v615
        %s617 = sand.u32 %s161, 1
        %s618 = scalar_lea.sflag [#allocation3], %s617
        %s619 = sand.u32 %s161, 1
        %s620 = smul.addr %s619, 8
        %s621 = scalar_lea.vmem [#allocation2], %s620
        // Predicated region
        $region37: #{tpu_custom_call.1} parent=35 // pred_check
          %p622 = pneg %p171
        $region38: #{tpu_custom_call.1} parent=35 // pred_check_branch
          %624 = sbr.rel (%p622) target = $region40
        $region39: #{tpu_custom_call.1} parent=35 // pred_region
          %s626 = ssub.s32 128, 128
          %627 = vsyncadd %s618, %s626
          %s628 = sadd.s32 %s25, %s24
          %s629 = sadd.s32 %s628, %s23
          %s630 = smul.addr %s629, 128
          %s631 = scalar_lea.hbm %s4, %s630
          %s633 = sshll.u32 %s621, 4
          %s634 = int_to_ptr.vmem [resolvable:$true] %s633
          %636 = dma.vmem_to_hbm [thread:$0]  %s634, 128, %s631, %s618
        $region40: #{tpu_custom_call.1} parent=35 // pred_fallthru
          _
      $region36: #{tpu_custom_call.1} parent=5 // pred_fallthru
        _
      %p637 = scmp.le.s32.totalorder 2, %s13
      // Predicated region
      $region41: #{tpu_custom_call.1} parent=5 // pred_check
        %p638 = pneg %p637
      $region42: #{tpu_custom_call.1} parent=5 // pred_check_branch
        %640 = sbr.rel (%p638) target = $region44
      $region43: #{tpu_custom_call.1} parent=5 // pred_region
        %s641 = ssub.s32 %s13, 2
        // Predicated region
        $region45: #{tpu_custom_call.1} parent=43 // pred_check
          %p642 = pneg %p177
        $region46: #{tpu_custom_call.1} parent=43 // pred_check_branch
          %644 = sbr.rel (%p642) target = $region48
        $region47: #{tpu_custom_call.1} parent=43 // pred_region
          %s645 = sand.u32 %s162, 1
          %s646 = scalar_lea.sflag [#allocation3], %s645
          %s647 = sand.u32 %s162, 1
          %s648 = smul.addr %s647, 8
          %s649 = scalar_lea.vmem [#allocation2], %s648
          %650 = dma.done %s646, 128
        $region48: #{tpu_custom_call.1} parent=43 // pred_fallthru
          _
      $region44: #{tpu_custom_call.1} parent=5 // pred_fallthru
        _
    $region6: #{tpu_custom_call.1} parent=1 // loop_footer
      %s17 = sadd.s32 1, %s13
    $region7: #{tpu_custom_call.1} parent=1 // loop_footer_branch
      %12 = sbr.rel target = $region3
    $region8: #{tpu_custom_call.1} parent=1 // loop_exit
      _
    %651 = vsyncpa [#allocation3], 1
    %s652 = scalar_lea.sflag [#allocation3], 1
    %653 = vsyncpa %s652, 1

</llo_original>
